<compile_context>
chip_gen: v7x
topology: tpu7x:2x2x1
jax: 0.10.0
libtpu: 0.0.40
codegen_flags: <defaults>
</compile_context>

<pallas_src>
import functools

import jax
import jax.numpy as jnp
from jax.experimental import pallas as pl
from jax.experimental.pallas import tpu as pltpu

LATENT_DIM = 10
HIDDEN_DIM = 50
OUTPUT_DIM = 32   # output_dim chosen for the synthetic example


def _round_up(x, m):
    return ((x + m - 1) // m) * m


def _decoder_kernel(z_ref, w1_ref, b1_ref, w2_ref, b2_ref, o_ref, *, use_sigmoid):
    # z_ref: (tile_b, latent)       -- unpadded feature axis
    # w1_ref: (latent, hidden_p)    b1_ref: (1, hidden_p)
    # w2_ref: (hidden_p, out_dim)   b2_ref: (1, out_dim)
    # o_ref: (tile_b, out_dim)      -- real output width, no padded lanes
    z = z_ref[...]
    h = jnp.dot(z, w1_ref[...], preferred_element_type=jnp.float32) + b1_ref[...]
    h = jnp.maximum(h, 0.0)                        # ReLU on the VPU
    out = jnp.dot(h, w2_ref[...], preferred_element_type=jnp.float32) + b2_ref[...]
    if use_sigmoid:
        out = jax.nn.sigmoid(out)                  # EUP transcendental, real cols only
    o_ref[...] = out.astype(o_ref.dtype)


def _decoder_forward_impl(z, w1p, b1p, w2p, b2p, *, use_sigmoid, max_tile_b):
    """z: (B, latent) f32.  w1p:(latent,hidden_p), b1p:(1,hidden_p),
    w2p:(hidden_p,out_dim), b2p:(1,out_dim) -- hidden axis already padded to a
    multiple of 128 by prepare_decoder_params (one-time).  Returns (B, out_dim)."""
    B, latent = z.shape
    hidden_p = w1p.shape[1]
    out_dim = w2p.shape[1]

    # Batch tiling: single step for small B; for large B use big tiles and an
    # EVEN step count so both v7x TensorCores get balanced work.
    steps = pl.cdiv(B, max_tile_b)
    if steps > 1 and steps % 2 != 0:
        steps += 1
    tile_b = _round_up(pl.cdiv(B, steps), 8)
    padded_B = tile_b * steps

    # Only row-pad the batch when needed (cheap; fuses under jit).  No feature
    # padding of z and no post-kernel column slice anymore.
    zp = jnp.pad(z, ((0, padded_B - B), (0, 0))) if padded_B != B else z

    # VMEM budget from the actual tiles: double-buffered z/out tiles,
    # (default double-buffered) resident weights, and the h intermediate,
    # with 2x headroom, clamped to [4, 32] MiB (safe on v5e/v6e/v7x).
    io_tile_bytes = 4 * tile_b * (latent + out_dim)
    weight_bytes = 4 * (latent * hidden_p + hidden_p + hidden_p * out_dim + out_dim)
    h_bytes = 4 * tile_b * hidden_p
    needed = 2 * io_tile_bytes + 2 * weight_bytes + h_bytes
    vmem_limit = int(min(max(2 * needed, 4 << 20), 32 << 20))

    # Cost estimate reflecting the bytes/flops actually moved/executed.
    flops = 2 * padded_B * (latent * hidden_p + hidden_p * out_dim)
    transcendentals = padded_B * out_dim if use_sigmoid else 0
    bytes_accessed = 4 * (padded_B * latent + latent * hidden_p + hidden_p
                          + hidden_p * out_dim + out_dim + padded_B * out_dim)

    kernel = functools.partial(_decoder_kernel, use_sigmoid=use_sigmoid)

    out_padded = pl.pallas_call(
        kernel,
        out_shape=jax.ShapeDtypeStruct((padded_B, out_dim), jnp.float32),
        grid=(steps,),
        in_specs=[
            pl.BlockSpec((tile_b, latent), lambda i: (i, 0)),    # z tile (pipelined)
            pl.BlockSpec((latent, hidden_p), lambda i: (0, 0)),  # W1 (resident)
            pl.BlockSpec((1, hidden_p), lambda i: (0, 0)),       # b1 (resident)
            pl.BlockSpec((hidden_p, out_dim), lambda i: (0, 0)), # W2 (resident)
            pl.BlockSpec((1, out_dim), lambda i: (0, 0)),        # b2 (resident)
        ],
        out_specs=pl.BlockSpec((tile_b, out_dim), lambda i: (i, 0)),
        compiler_params=pltpu.CompilerParams(
            dimension_semantics=("parallel",),
            vmem_limit_bytes=vmem_limit),
        cost_estimate=pl.CostEstimate(
            flops=flops,
            transcendentals=transcendentals,
            bytes_accessed=bytes_accessed),
    )(zp, w1p, b1p, w2p, b2p)

    return out_padded[:B] if padded_B != B else out_padded


# jit so the (rare) row pad / row slice fuse with the dispatch.
decoder_forward = jax.jit(_decoder_forward_impl,
                          static_argnames=("use_sigmoid", "max_tile_b"))


def prepare_decoder_params(w1, b1, w2, b2):
    """One-time parameter prep (NOT on the hot path): pad the hidden axis to a
    multiple of 128 so h is lane-dense and W2's sublane dim is 8-aligned.
    Padded hidden columns have zero W1 cols / zero b1 -> relu(0)=0, and zero W2
    rows -> contribute nothing, so results are exact."""
    latent, hidden = w1.shape
    out_dim = w2.shape[1]
    hidden_p = _round_up(hidden, 128)
    w1p = jnp.zeros((latent, hidden_p), jnp.float32).at[:, :hidden].set(w1)
    b1p = jnp.zeros((1, hidden_p), jnp.float32).at[:, :hidden].set(b1)
    w2p = jnp.zeros((hidden_p, out_dim), jnp.float32).at[:hidden, :].set(w2)
    b2p = jnp.asarray(b2, jnp.float32).reshape(1, out_dim)
    return w1p, b1p, w2p, b2p


def init_decoder_params(key, latent_dim, hidden_dim, output_dim):
    """Deterministic init mimicking nn.Linear (uniform +-1/sqrt(fan_in)).
    Weights stored as [in, out] (PyTorch nn.Linear weight transposed once)."""
    k1, k2, k3, k4 = jax.random.split(key, 4)
    lim1 = 1.0 / jnp.sqrt(latent_dim)
    lim2 = 1.0 / jnp.sqrt(hidden_dim)
    w1 = jax.random.uniform(k1, (latent_dim, hidden_dim), jnp.float32, -lim1, lim1)
    b1 = jax.random.uniform(k2, (1, hidden_dim), jnp.float32, -lim1, lim1)
    w2 = jax.random.uniform(k3, (hidden_dim, output_dim), jnp.float32, -lim2, lim2)
    b2 = jax.random.uniform(k4, (1, output_dim), jnp.float32, -lim2, lim2)
    return w1, b1, w2, b2


def decoder_reference(z, w1, b1, w2, b2, use_sigmoid=False):
    h = jnp.maximum(z @ w1 + b1, 0.0)
    out = h @ w2 + b2
    return jax.nn.sigmoid(out) if use_sigmoid else out


if __name__ == "__main__":
    key = jax.random.PRNGKey(0)
    k_params, k_z = jax.random.split(key)

    B = 16  # small batch -> single grid step (tile_b = 16)
    w1, b1, w2, b2 = init_decoder_params(k_params, LATENT_DIM, HIDDEN_DIM, OUTPUT_DIM)
    w1p, b1p, w2p, b2p = prepare_decoder_params(w1, b1, w2, b2)   # one-time
    z = jax.random.normal(k_z, (B, LATENT_DIM), jnp.float32)

    out = jax.block_until_ready(
        decoder_forward(z, w1p, b1p, w2p, b2p, use_sigmoid=False, max_tile_b=8192))
    ref = decoder_reference(z, w1, b1, w2, b2, use_sigmoid=False)
    assert out.shape == (B, OUTPUT_DIM)
    assert jnp.allclose(out, ref, atol=1e-5, rtol=1e-5)

    # Exercise the use_sigmoid=True branch.
    out_sig = jax.block_until_ready(
        decoder_forward(z, w1p, b1p, w2p, b2p, use_sigmoid=True, max_tile_b=8192))
    ref_sig = decoder_reference(z, w1, b1, w2, b2, use_sigmoid=True)
    assert jnp.allclose(out_sig, ref_sig, atol=1e-5, rtol=1e-5)

    # Batch that is NOT a multiple of 8 (row-padded single tile, sliced back).
    z_odd = jax.random.normal(k_z, (7, LATENT_DIM), jnp.float32)
    out_odd = jax.block_until_ready(
        decoder_forward(z_odd, w1p, b1p, w2p, b2p, use_sigmoid=False, max_tile_b=8192))
    ref_odd = decoder_reference(z_odd, w1, b1, w2, b2)
    assert out_odd.shape == (7, OUTPUT_DIM)
    assert jnp.allclose(out_odd, ref_odd, atol=1e-5, rtol=1e-5)

    print("KERNEL_OK")
</pallas_src>

<mosaic_0001>
module attributes {stable_mosaic.version = 11 : i64} {
  func.func @_decoder_kernel(%arg0: i32, %arg1: memref<16x10xf32, #tpu.memory_space<vmem>>, %arg2: memref<10x128xf32, #tpu.memory_space<vmem>>, %arg3: memref<1x128xf32, #tpu.memory_space<vmem>>, %arg4: memref<128x32xf32, #tpu.memory_space<vmem>>, %arg5: memref<1x32xf32, #tpu.memory_space<vmem>>, %arg6: memref<16x32xf32, #tpu.memory_space<vmem>>) attributes {dimension_semantics = [#tpu.dimension_semantics<parallel>], iteration_bounds = array<i64: 1>, scalar_prefetch = 0 : i64, scratch_operands = 0 : i64, tpu.core_type = #tpu.core_type<tc>, window_params = [{transform_indices = @transform_0, window_bounds = array<i64: 16, 10>}, {pipeline_mode = #tpu.pipeline_mode<synchronous>, transform_indices = @transform_1, window_bounds = array<i64: 10, 128>}, {pipeline_mode = #tpu.pipeline_mode<synchronous>, transform_indices = @transform_2, window_bounds = array<i64: 1, 128>}, {pipeline_mode = #tpu.pipeline_mode<synchronous>, transform_indices = @transform_3, window_bounds = array<i64: 128, 32>}, {pipeline_mode = #tpu.pipeline_mode<synchronous>, transform_indices = @transform_4, window_bounds = array<i64: 1, 32>}, {transform_indices = @transform_5, window_bounds = array<i64: 16, 32>}]} {
    %c0 = arith.constant 0 : index
    %c0_0 = arith.constant 0 : index
    %0 = vector.load %arg1[%c0, %c0_0] : memref<16x10xf32, #tpu.memory_space<vmem>>, vector<16x10xf32>
    %c0_1 = arith.constant 0 : index
    %c0_2 = arith.constant 0 : index
    %1 = vector.load %arg2[%c0_1, %c0_2] : memref<10x128xf32, #tpu.memory_space<vmem>>, vector<10x128xf32>
    %cst = arith.constant dense<0.000000e+00> : vector<16x128xf32>
    %2 = tpu.matmul %0, %1, %cst {dimension_numbers = #tpu.dot_dimension_numbers<[1], [0], [0], [1], [0, 0, 1, 1], [], []>} : vector<16x10xf32>, vector<10x128xf32>, vector<16x128xf32> -> vector<16x128xf32>
    %c0_3 = arith.constant 0 : index
    %c0_4 = arith.constant 0 : index
    %3 = vector.load %arg3[%c0_3, %c0_4] : memref<1x128xf32, #tpu.memory_space<vmem>>, vector<1x128xf32>
    %4 = vector.broadcast %3 : vector<1x128xf32> to vector<16x128xf32>
    %5 = arith.addf %2, %4 : vector<16x128xf32>
    %cst_5 = arith.constant 0.000000e+00 : f32
    %6 = vector.broadcast %cst_5 : f32 to vector<16x128xf32>
    %7 = arith.maximumf %5, %6 : vector<16x128xf32>
    %c0_6 = arith.constant 0 : index
    %c0_7 = arith.constant 0 : index
    %8 = vector.load %arg4[%c0_6, %c0_7] : memref<128x32xf32, #tpu.memory_space<vmem>>, vector<128x32xf32>
    %cst_8 = arith.constant dense<0.000000e+00> : vector<16x32xf32>
    %9 = tpu.matmul %7, %8, %cst_8 {dimension_numbers = #tpu.dot_dimension_numbers<[1], [0], [0], [1], [0, 0, 1, 1], [], []>} : vector<16x128xf32>, vector<128x32xf32>, vector<16x32xf32> -> vector<16x32xf32>
    %c0_9 = arith.constant 0 : index
    %c0_10 = arith.constant 0 : index
    %10 = vector.load %arg5[%c0_9, %c0_10] : memref<1x32xf32, #tpu.memory_space<vmem>>, vector<1x32xf32>
    %11 = vector.broadcast %10 : vector<1x32xf32> to vector<16x32xf32>
    %12 = arith.addf %9, %11 : vector<16x32xf32>
    %c0_11 = arith.constant 0 : index
    %c0_12 = arith.constant 0 : index
    %13 = vector.load %arg6[%c0_11, %c0_12] : memref<16x32xf32, #tpu.memory_space<vmem>>, vector<16x32xf32>
    tpu.vector_store %arg6[%c0_11, %c0_12], %12 {strides = array<i32>} : memref<16x32xf32, #tpu.memory_space<vmem>>, vector<16x32xf32>,
    return
  }
  func.func @transform_0(%arg0: i32) -> (i32, i32) {
    %c0_i32 = arith.constant 0 : i32
    %c0_i32_0 = arith.constant 0 : i32
    return %arg0, %c0_i32 : i32, i32
  }
  func.func @transform_1(%arg0: i32) -> (i32, i32) {
    %c0_i32 = arith.constant 0 : i32
    %c0_i32_0 = arith.constant 0 : i32
    %c0_i32_1 = arith.constant 0 : i32
    return %c0_i32, %c0_i32_0 : i32, i32
  }
  func.func @transform_2(%arg0: i32) -> (i32, i32) {
    %c0_i32 = arith.constant 0 : i32
    %c0_i32_0 = arith.constant 0 : i32
    %c0_i32_1 = arith.constant 0 : i32
    return %c0_i32, %c0_i32_0 : i32, i32
  }
  func.func @transform_3(%arg0: i32) -> (i32, i32) {
    %c0_i32 = arith.constant 0 : i32
    %c0_i32_0 = arith.constant 0 : i32
    %c0_i32_1 = arith.constant 0 : i32
    return %c0_i32, %c0_i32_0 : i32, i32
  }
  func.func @transform_4(%arg0: i32) -> (i32, i32) {
    %c0_i32 = arith.constant 0 : i32
    %c0_i32_0 = arith.constant 0 : i32
    %c0_i32_1 = arith.constant 0 : i32
    return %c0_i32, %c0_i32_0 : i32, i32
  }
  func.func @transform_5(%arg0: i32) -> (i32, i32) {
    %c0_i32 = arith.constant 0 : i32
    %c0_i32_0 = arith.constant 0 : i32
    return %arg0, %c0_i32 : i32, i32
  }
}

</mosaic_0001>

<llo_original>
// kernel: _decoder_forward_impl.1
$region0: #{_decoder_forward_impl.1}
  #allocation0 [shape = 'u32[]', space=smem, size = 0x4, offset = 0x4, fixed_abs, tag = 'smem constant byte address 0x4 - core index']
  #allocation1 [shape = 'u32[144,128]{1,0:T(1,128)}', space=vmem, size = 0x12000, scoped, tag = 'internal scratch']
  %s0 = inlined_call_operand.vmem [shape: f32[16,10], index: 0, kind: input, shape index: {}]
  %s1 = inlined_call_operand.vmem [shape: f32[10,128], index: 1, kind: input, shape index: {}]
  %s2 = inlined_call_operand.vmem [shape: f32[1,128], index: 2, kind: input, shape index: {}]
  %s3 = inlined_call_operand.vmem [shape: f32[128,32], index: 3, kind: input, shape index: {}]
  %s4 = inlined_call_operand.vmem [shape: f32[1,32], index: 4, kind: input, shape index: {}]
  %s5 = inlined_call_operand.hbm [shape: f32[16,32], index: 5, kind: output, shape index: {}]
  %s6 = sld [smem:[#allocation0]]
  $region30: #{_decoder_forward_impl.1} parent=0
    _
  %s8 = ssub.s32 1, %s6
  %s9 = scalar_select 0, %s8, %s6
  $region1: #{_decoder_forward_impl.1} parent=0
    #allocation2 [shape = 'u8[8192]{0}', space=vmem, size = 0x2000, scoped, tag = 'output window, operand 0, single buffered']
    #allocation3 [shape = 's32[1]{0}', space=sflag, size = 0x4, scoped, tag = 'scoped memory for _decoder_forward_impl.1']
    %10 = vsyncpa [#allocation3], 0
    // Predicated region
    $region2: #{_decoder_forward_impl.1} parent=1 // pred_check
      _
    $region3: #{_decoder_forward_impl.1} parent=1 // pred_check_branch
      %12 = sbr.rel (0) target = $region5
    $region4: #{_decoder_forward_impl.1} parent=1 // pred_region
      _
    $region5: #{_decoder_forward_impl.1} parent=1 // pred_fallthru
      _
    // Predicated region
    $region6: #{_decoder_forward_impl.1} parent=1 // pred_check
      _
    $region7: #{_decoder_forward_impl.1} parent=1 // pred_check_branch
      %14 = sbr.rel (0) target = $region9
    $region8: #{_decoder_forward_impl.1} parent=1 // pred_region
      _
    $region9: #{_decoder_forward_impl.1} parent=1 // pred_fallthru
      _
    // Predicated region
    $region10: #{_decoder_forward_impl.1} parent=1 // pred_check
      _
    $region11: #{_decoder_forward_impl.1} parent=1 // pred_check_branch
      %16 = sbr.rel (0) target = $region13
    $region12: #{_decoder_forward_impl.1} parent=1 // pred_region
      _
    $region13: #{_decoder_forward_impl.1} parent=1 // pred_fallthru
      _
    // Predicated region
    $region14: #{_decoder_forward_impl.1} parent=1 // pred_check
      _
    $region15: #{_decoder_forward_impl.1} parent=1 // pred_check_branch
      %18 = sbr.rel (0) target = $region17
    $region16: #{_decoder_forward_impl.1} parent=1 // pred_region
      _
    $region17: #{_decoder_forward_impl.1} parent=1 // pred_fallthru
      _
    // Predicated region
    $region18: #{_decoder_forward_impl.1} parent=1 // pred_check
      _
    $region19: #{_decoder_forward_impl.1} parent=1 // pred_check_branch
      %20 = sbr.rel (0) target = $region21
    $region20: #{_decoder_forward_impl.1} parent=1 // pred_region
      _
    $region21: #{_decoder_forward_impl.1} parent=1 // pred_fallthru
      _
    %v21 = vld [vmem:[%s0] sm:$0xff]
    %v22 = vld [vmem:[%s0 + $0x8] sm:$0xff]
    %v23 = vld [vmem:[%s1] sm:$0xff]
    %v24 = vld [vmem:[%s1 + $0x8] sm:$0x3]
    %v25 = vld [vmem:[%s2] sm:$0x1]
    %v27 = vlaneseq
    %v28 = vshrl.u32 %v27, 7
    %v29 = vsub.s32 0, %v28
    %v30 = vrot.slane %v25, %v29
    %vm32 = vcmask 80896
    %v34 = vsel %vm32, %v21, 0
    %v37 = vsel %vm32, %v22, 0
    %vm39 = vcmask 1041408
    %v41 = vsel %vm39, %v24, 0
    %43 = vmatprep.subr.mxu0 0.0
    %44 = vmatpush1.msra.mxu0 %v23
    %45 = vmatprep.subr.mxu0 0.0
    %46 = vmatpush1.msra.mxu0 %v41
    %47 = vmatprep.subr.mxu0 0.0
    %48 = vmatpush1.msra.mxu0 0.0
    %49 = vmatprep.subr.mxu0 0.0
    %50 = vmatpush1.msra.mxu0 0.0
    %51 = vmatprep.subr.mxu0 0.0
    %52 = vmatpush1.msra.mxu0 0.0
    %53 = vmatprep.subr.mxu0 0.0
    %54 = vmatpush1.msra.mxu0 0.0
    %55 = vmatprep.subr.mxu0 0.0
    %56 = vmatpush1.msra.mxu0 0.0
    %57 = vmatprep.subr.mxu0 0.0
    %58 = vmatpush1.msra.mxu0 0.0
    %59 = vmatprep.subr.mxu0 0.0
    %60 = vmatpush1.msra.mxu0 0.0
    %61 = vmatprep.subr.mxu0 0.0
    %62 = vmatpush1.msra.mxu0 0.0
    %63 = vmatprep.subr.mxu0 0.0
    %64 = vmatpush1.msra.mxu0 0.0
    %65 = vmatprep.subr.mxu0 0.0
    %66 = vmatpush1.msra.mxu0 0.0
    %67 = vmatprep.subr.mxu0 0.0
    %68 = vmatpush1.msra.mxu0 0.0
    %69 = vmatprep.subr.mxu0 0.0
    %70 = vmatpush1.msra.mxu0 0.0
    %71 = vmatprep.subr.mxu0 0.0
    %72 = vmatpush1.msra.mxu0 0.0
    %73 = vmatprep.subr.mxu0 0.0
    %74 = vmatpush1.msra.mxu0 0.0
    %75 = vmatprep.subr.mxu0 0.0
    %76 = vmatpush1.msra.mxu0 0.0
    %77 = vmatprep.subr.mxu0 0.0
    %78 = vmatpush1.msra.mxu0 0.0
    %79 = vmatprep.subr.mxu0 0.0
    %80 = vmatpush1.msra.mxu0 0.0
    %81 = vmatprep.subr.mxu0 0.0
    %82 = vmatpush1.msra.mxu0 0.0
    %83 = vmatprep.subr.mxu0 0.0
    %84 = vmatpush1.msra.mxu0 0.0
    %85 = vmatprep.subr.mxu0 0.0
    %86 = vmatpush1.msra.mxu0 0.0
    %87 = vmatprep.subr.mxu0 0.0
    %88 = vmatpush1.msra.mxu0 0.0
    %89 = vmatprep.subr.mxu0 0.0
    %90 = vmatpush1.msra.mxu0 0.0
    %91 = vmatprep.subr.mxu0 0.0
    %92 = vmatpush1.msra.mxu0 0.0
    %93 = vmatprep.subr.mxu0 0.0
    %94 = vmatpush1.msra.mxu0 0.0
    %95 = vmatprep.subr.mxu0 0.0
    %96 = vmatpush1.msra.mxu0 0.0
    %97 = vmatprep.subr.mxu0 0.0
    %98 = vmatpush1.msra.mxu0 0.0
    %99 = vmatprep.subr.mxu0 0.0
    %100 = vmatpush1.msra.mxu0 0.0
    %101 = vmatprep.subr.mxu0 0.0
    %102 = vmatpush1.msra.mxu0 0.0
    %103 = vmatprep.subr.mxu0 0.0
    %104 = vmatpush1.msra.mxu0 0.0
    %105 = vmatprep.subr.mxu0 0.0
    %106 = vmatpush1.msra.mxu0 0.0
    %107 = vmatprep.mubr.f32.mxu0 0.0
    %108 = vmatmul.mubr.f32.gmra.mrb[0].mxu0 %v34
    %v109 = vpop.f32.mrb[0].mxu0
    %v110 = vadd.f32 %v30, %v109
    %v111 = vpop.f32.mrb[0].mxu0
    %112 = vmatprep.mubr.f32.mxu0 0.0
    %113 = vmatmul.mubr.f32.gmra.mrb[0].mxu0 %v37
    %v114 = vpop.f32.mrb[0].mxu0
    %v115 = vadd.f32 %v30, %v114
    %v116 = vpop.f32.mrb[0].mxu0
    %117 = vdwg.mxu0
    %v118 = vmax.f32 %v110, 0.0
    %v119 = vmax.f32 %v115, 0.0
    %v120 = vld [vmem:[%s3] sm:$0xff]
    %v121 = vld [vmem:[%s3 + $0x8] sm:$0xff]
    %v122 = vld [vmem:[%s3 + $0x10] sm:$0xff]
    %v123 = vld [vmem:[%s3 + $0x18] sm:$0xff]
    %v124 = vld [vmem:[%s3 + $0x20] sm:$0xff]
    %v125 = vld [vmem:[%s3 + $0x28] sm:$0xff]
    %v126 = vld [vmem:[%s3 + $0x30] sm:$0xff]
    %v127 = vld [vmem:[%s3 + $0x38] sm:$0xff]
    %v128 = vld [vmem:[%s3 + $0x40] sm:$0xff]
    %v129 = vld [vmem:[%s3 + $0x48] sm:$0xff]
    %v130 = vld [vmem:[%s3 + $0x50] sm:$0xff]
    %v131 = vld [vmem:[%s3 + $0x58] sm:$0xff]
    %v132 = vld [vmem:[%s3 + $0x60] sm:$0xff]
    %v133 = vld [vmem:[%s3 + $0x68] sm:$0xff]
    %v134 = vld [vmem:[%s3 + $0x70] sm:$0xff]
    %v135 = vld [vmem:[%s3 + $0x78] sm:$0xff]
    %v136 = vld [vmem:[%s4] sm:$0x1]
    %v138 = vlaneseq
    %v139 = vshrl.u32 %v138, 7
    %v140 = vsub.s32 0, %v139
    %v141 = vrot.slane %v136, %v140
    %143 = vmatprep.subr.mxu0 0.0
    %144 = vmatpush1.msra.mxu0 %v120
    %145 = vmatprep.subr.mxu0 0.0
    %146 = vmatpush1.msra.mxu0 %v121
    %147 = vmatprep.subr.mxu0 0.0
    %148 = vmatpush1.msra.mxu0 %v122
    %149 = vmatprep.subr.mxu0 0.0
    %150 = vmatpush1.msra.mxu0 %v123
    %151 = vmatprep.subr.mxu0 0.0
    %152 = vmatpush1.msra.mxu0 %v124
    %153 = vmatprep.subr.mxu0 0.0
    %154 = vmatpush1.msra.mxu0 %v125
    %155 = vmatprep.subr.mxu0 0.0
    %156 = vmatpush1.msra.mxu0 %v126
    %157 = vmatprep.subr.mxu0 0.0
    %158 = vmatpush1.msra.mxu0 %v127
    %159 = vmatprep.subr.mxu0 0.0
    %160 = vmatpush1.msra.mxu0 %v128
    %161 = vmatprep.subr.mxu0 0.0
    %162 = vmatpush1.msra.mxu0 %v129
    %163 = vmatprep.subr.mxu0 0.0
    %164 = vmatpush1.msra.mxu0 %v130
    %165 = vmatprep.subr.mxu0 0.0
    %166 = vmatpush1.msra.mxu0 %v131
    %167 = vmatprep.subr.mxu0 0.0
    %168 = vmatpush1.msra.mxu0 %v132
    %169 = vmatprep.subr.mxu0 0.0
    %170 = vmatpush1.msra.mxu0 %v133
    %171 = vmatprep.subr.mxu0 0.0
    %172 = vmatpush1.msra.mxu0 %v134
    %173 = vmatprep.subr.mxu0 0.0
    %174 = vmatpush1.msra.mxu0 %v135
    %175 = vmatprep.subr.mxu0 0.0
    %176 = vmatpush1.msra.mxu0 0.0
    %177 = vmatprep.subr.mxu0 0.0
    %178 = vmatpush1.msra.mxu0 0.0
    %179 = vmatprep.subr.mxu0 0.0
    %180 = vmatpush1.msra.mxu0 0.0
    %181 = vmatprep.subr.mxu0 0.0
    %182 = vmatpush1.msra.mxu0 0.0
    %183 = vmatprep.subr.mxu0 0.0
    %184 = vmatpush1.msra.mxu0 0.0
    %185 = vmatprep.subr.mxu0 0.0
    %186 = vmatpush1.msra.mxu0 0.0
    %187 = vmatprep.subr.mxu0 0.0
    %188 = vmatpush1.msra.mxu0 0.0
    %189 = vmatprep.subr.mxu0 0.0
    %190 = vmatpush1.msra.mxu0 0.0
    %191 = vmatprep.subr.mxu0 0.0
    %192 = vmatpush1.msra.mxu0 0.0
    %193 = vmatprep.subr.mxu0 0.0
    %194 = vmatpush1.msra.mxu0 0.0
    %195 = vmatprep.subr.mxu0 0.0
    %196 = vmatpush1.msra.mxu0 0.0
    %197 = vmatprep.subr.mxu0 0.0
    %198 = vmatpush1.msra.mxu0 0.0
    %199 = vmatprep.subr.mxu0 0.0
    %200 = vmatpush1.msra.mxu0 0.0
    %201 = vmatprep.subr.mxu0 0.0
    %202 = vmatpush1.msra.mxu0 0.0
    %203 = vmatprep.subr.mxu0 0.0
    %204 = vmatpush1.msra.mxu0 0.0
    %205 = vmatprep.subr.mxu0 0.0
    %206 = vmatpush1.msra.mxu0 0.0
    %207 = vmatprep.mubr.f32.mxu0 0.0
    %208 = vmatmul.mubr.f32.gmra.mrb[0].mxu0 %v118
    %v209 = vpop.f32.mrb[0].mxu0
    %v210 = vadd.f32 %v141, %v209
    %v211 = vpop.f32.mrb[0].mxu0
    %212 = vmatprep.mubr.f32.mxu0 0.0
    %213 = vmatmul.mubr.f32.gmra.mrb[0].mxu0 %v119
    %v214 = vpop.f32.mrb[0].mxu0
    %v215 = vadd.f32 %v141, %v214
    %v216 = vpop.f32.mrb[0].mxu0
    %217 = vdwg.mxu0
    %vm218 = vcmask 261120
    %219 = vst.msk [vmem:[#allocation2] sm:$0xff] %vm218, %v210
    %220 = vst.msk [vmem:[#allocation2 + $0x8] sm:$0xff] %vm218, %v215
    // Predicated region
    $region22: #{_decoder_forward_impl.1} parent=1 // pred_check
      _
    $region23: #{_decoder_forward_impl.1} parent=1 // pred_check_branch
      %222 = sbr.rel (0) target = $region25
    $region24: #{_decoder_forward_impl.1} parent=1 // pred_region
      %s224 = ssub.s32 256, 256
      %225 = vsyncadd [#allocation3], %s224
      %s226 = sshll.u32 [#allocation2], 4
      %s227 = int_to_ptr.vmem [resolvable:$true] %s226
      %232 = dma.vmem_to_hbm [thread:$0]  %s227, 256, %s5, [#allocation3], 128, 128, 8
    $region25: #{_decoder_forward_impl.1} parent=1 // pred_fallthru
      _
    // Predicated region
    $region26: #{_decoder_forward_impl.1} parent=1 // pred_check
      _
    $region27: #{_decoder_forward_impl.1} parent=1 // pred_check_branch
      %234 = sbr.rel (0) target = $region29
    $region28: #{_decoder_forward_impl.1} parent=1 // pred_region
      %235 = dma.done [#allocation3], 256
    $region29: #{_decoder_forward_impl.1} parent=1 // pred_fallthru
      _
    %236 = vsyncpa [#allocation3], 1

</llo_original>
